<compile_context>
chip_gen: v7x
topology: tpu7x:2x2x1
jax: 0.10.0
libtpu: 0.0.40
codegen_flags: <defaults>
</compile_context>

<pallas_src>
import functools

import jax
import jax.numpy as jnp
from jax import lax
from jax.experimental import pallas as pl
from jax.experimental.pallas import tpu as pltpu


def _round_up(x, m):
    return (x + m - 1) // m * m


def _tile_batch(B, tb_cap, min_tiles):
    """Pick batch tile TB (multiple of 128, capped) and grid size. No host padding."""
    B128 = _round_up(B, 128)
    if B128 <= 128:
        # Single full-extent block (full-array blocks are exempt from (8,128)).
        return B, 1
    n = max(min_tiles, -(-B128 // tb_cap))
    gran = 512 if B128 >= 512 * n else 128
    TB = _round_up(-(-B128 // n), gran)
    n_tiles = -(-B // TB)
    return TB, n_tiles


def _actor_kernel(s_ref, wa_ref, b1_ref, w2_ref, b2_ref, w3_ref, b3_ref,
                  w40_ref, b40_ref, w4r_ref, b4r_ref, out_ref, *, hidden):
    # Layer 1 + "transpose" of the action slice in one NT matmul on the MXU:
    #   aug = Wa @ s^T,  Wa = [[W1, 0], [0, I]]  ->  [H + as_dim, TB]
    aug = lax.dot_general(wa_ref[...], s_ref[...],
                          dimension_numbers=(((1,), (1,)), ((), ())),
                          preferred_element_type=jnp.float32)
    h = jnp.maximum(aug[:hidden, :] + b1_ref[...], 0.0)      # [H, TB]
    s_as_t = aug[hidden:, :]                                  # [as_dim, TB]

    h = jnp.maximum(jnp.dot(w2_ref[...], h, preferred_element_type=jnp.float32)
                    + b2_ref[...], 0.0)
    h = jnp.maximum(jnp.dot(w3_ref[...], h, preferred_element_type=jnp.float32)
                    + b3_ref[...], 0.0)

    # Last layer pre-split: row 0 multiplies the implicit ones column (VPU
    # broadcast-multiply + sublane reduce), rows 1: multiply the action slice.
    x0 = jnp.sum(w40_ref[...] * h, axis=0, keepdims=True) + b40_ref[...]     # [1, TB]
    xr = (jnp.dot(w4r_ref[...], h, preferred_element_type=jnp.float32)
          + b4r_ref[...])                                                     # [as_dim, TB]

    # action = x0 + sum_f s_as[f] * xr[f]   -> lane-dense [1, TB] store.
    out_ref[...] = x0 + jnp.sum(s_as_t * xr, axis=0, keepdims=True)


@functools.partial(jax.jit, static_argnames=("input_size", "tb_cap", "min_tiles"))
def actor_forward(s, params, input_size, tb_cap=4096, min_tiles=2):
    """s: [B, input_size + as_dim] f32 -> action: [B, 1] f32."""
    B, F = s.shape
    as_dim = F - input_size
    w1, b1, w2, b2, w3, b3, w4, b4 = params
    H = w1.shape[0]
    f32 = jnp.float32
    s = s.astype(f32)

    # Identity-augmented layer-1 weight + bias/weight repacking (all tiny,
    # built per call under jit; a few KiB of XLA work).
    wa = jnp.zeros((H + as_dim, F), f32)
    wa = wa.at[:H, :input_size].set(w1.astype(f32))
    wa = wa.at[H:, input_size:].set(jnp.eye(as_dim, dtype=f32))
    b1c = b1.reshape(H, 1).astype(f32)
    b2c = b2.reshape(H, 1).astype(f32)
    b3c = b3.reshape(H, 1).astype(f32)
    w2f, w3f = w2.astype(f32), w3.astype(f32)
    w40 = w4[0].reshape(H, 1).astype(f32)            # constant-coefficient row, as a column
    b40 = b4[0].reshape(1, 1).astype(f32)
    w4r = w4[1:].astype(f32)                          # [as_dim, H]
    b4r = b4[1:].reshape(as_dim, 1).astype(f32)

    TB, n_tiles = _tile_batch(B, tb_cap, min_tiles)

    def resident(arr):        # tiny weights: same (only) block every grid step
        return pl.BlockSpec(arr.shape, lambda i: (0,) * arr.ndim)

    flops = (2 * B * ((H + as_dim) * F + 2 * H * H + (as_dim + 1) * H)
             + 10 * B * (H + as_dim))
    bytes_accessed = (B * F * 4 + B * 4
                      + 4 * (wa.size + w2f.size + w3f.size + w4r.size
                             + 3 * H + as_dim + 2))

    out = pl.pallas_call(
        functools.partial(_actor_kernel, hidden=H),
        out_shape=jax.ShapeDtypeStruct((1, B), f32),
        grid=(n_tiles,),
        in_specs=[
            pl.BlockSpec((TB, F), lambda i: (i, 0)),    # s streams batch-major
            resident(wa), resident(b1c),
            resident(w2f), resident(b2c),
            resident(w3f), resident(b3c),
            resident(w40), resident(b40),
            resident(w4r), resident(b4r),
        ],
        out_specs=pl.BlockSpec((1, TB), lambda i: (0, i)),
        compiler_params=pltpu.CompilerParams(
            dimension_semantics=("parallel",)),
        cost_estimate=pl.CostEstimate(
            flops=flops, transcendentals=0, bytes_accessed=bytes_accessed),
    )(s, wa, b1c, w2f, b2c, w3f, b3c, w40, b40, w4r, b4r)

    return out.T                                        # [B, 1]


def init_params(key, input_size, hidden_size, as_dim, large_weight=0.01):
    """PyTorch nn.Linear-style params: weight [out, in] ~ N(0, 0.01), bias zeros."""
    k1, k2, k3, k4 = jax.random.split(key, 4)

    def w(k, o, i):
        return jax.random.normal(k, (o, i), jnp.float32) * large_weight

    return (w(k1, hidden_size, input_size), jnp.zeros((hidden_size,), jnp.float32),
            w(k2, hidden_size, hidden_size), jnp.zeros((hidden_size,), jnp.float32),
            w(k3, hidden_size, hidden_size), jnp.zeros((hidden_size,), jnp.float32),
            w(k4, as_dim + 1, hidden_size), jnp.zeros((as_dim + 1,), jnp.float32))


def actor_forward_ref(s, params, input_size):
    """Pure-JAX f32 reference mirroring the PyTorch module."""
    w1, b1, w2, b2, w3, b3, w4, b4 = params
    hi = jax.lax.Precision.HIGHEST

    def lin(x, w, b):
        return jnp.dot(x, w.T, precision=hi) + b

    s_main = s[:, :input_size]
    tmp = s[:, input_size:]
    x = jax.nn.relu(lin(s_main, w1, b1))
    x = jax.nn.relu(lin(x, w2, b2))
    x = jax.nn.relu(lin(x, w3, b3))
    x = lin(x, w4, b4)
    ones = jnp.ones((s.shape[0], 1), s.dtype)
    cat = jnp.concatenate([ones, tmp], axis=-1)
    return jnp.sum(cat * x, axis=1, keepdims=True)


def _check(out, ref):
    scale = float(jnp.max(jnp.abs(ref)))
    err = float(jnp.max(jnp.abs(out - ref)))
    assert err <= 2e-2 * scale + 1e-7, (err, scale)


if __name__ == "__main__":
    input_size = 32
    hidden_size = 32
    as_dim = input_size // 2            # = 16; s has input_size + as_dim columns

    key = jax.random.PRNGKey(0)
    k_p, k_s1, k_s2 = jax.random.split(key, 3)
    params = init_params(k_p, input_size, hidden_size, as_dim)

    # Small single-tile case (grid = 1, full-extent blocks).
    B = 8
    s = jax.random.normal(k_s1, (B, input_size + as_dim), jnp.float32)
    out = jax.block_until_ready(actor_forward(s, params, input_size))
    assert out.shape == (B, 1)
    _check(out, actor_forward_ref(s, params, input_size))

    # Multi-tile case with a ragged last tile (grid >= 2; exercises the
    # no-host-padding path and the v7x-style two-way tile split).
    B2 = 200
    s2 = jax.random.normal(k_s2, (B2, input_size + as_dim), jnp.float32)
    out2 = jax.block_until_ready(actor_forward(s2, params, input_size))
    assert out2.shape == (B2, 1)
    _check(out2, actor_forward_ref(s2, params, input_size))

    print("KERNEL_OK")
</pallas_src>

<mosaic_0001>
module attributes {stable_mosaic.version = 11 : i64} {
  func.func @_actor_kernel(%arg0: i32, %arg1: memref<8x48xf32, #tpu.memory_space<vmem>>, %arg2: memref<48x48xf32, #tpu.memory_space<vmem>>, %arg3: memref<32x1xf32, #tpu.memory_space<vmem>>, %arg4: memref<32x32xf32, #tpu.memory_space<vmem>>, %arg5: memref<32x1xf32, #tpu.memory_space<vmem>>, %arg6: memref<32x32xf32, #tpu.memory_space<vmem>>, %arg7: memref<32x1xf32, #tpu.memory_space<vmem>>, %arg8: memref<32x1xf32, #tpu.memory_space<vmem>>, %arg9: memref<1x1xf32, #tpu.memory_space<vmem>>, %arg10: memref<16x32xf32, #tpu.memory_space<vmem>>, %arg11: memref<16x1xf32, #tpu.memory_space<vmem>>, %arg12: memref<1x8xf32, #tpu.memory_space<vmem>>) attributes {dimension_semantics = [#tpu.dimension_semantics<parallel>], iteration_bounds = array<i64: 1>, scalar_prefetch = 0 : i64, scratch_operands = 0 : i64, tpu.core_type = #tpu.core_type<tc>, window_params = [{transform_indices = @transform_0, window_bounds = array<i64: 8, 48>}, {pipeline_mode = #tpu.pipeline_mode<synchronous>, transform_indices = @transform_1, window_bounds = array<i64: 48, 48>}, {pipeline_mode = #tpu.pipeline_mode<synchronous>, transform_indices = @transform_2, window_bounds = array<i64: 32, 1>}, {pipeline_mode = #tpu.pipeline_mode<synchronous>, transform_indices = @transform_3, window_bounds = array<i64: 32, 32>}, {pipeline_mode = #tpu.pipeline_mode<synchronous>, transform_indices = @transform_4, window_bounds = array<i64: 32, 1>}, {pipeline_mode = #tpu.pipeline_mode<synchronous>, transform_indices = @transform_5, window_bounds = array<i64: 32, 32>}, {pipeline_mode = #tpu.pipeline_mode<synchronous>, transform_indices = @transform_6, window_bounds = array<i64: 32, 1>}, {pipeline_mode = #tpu.pipeline_mode<synchronous>, transform_indices = @transform_7, window_bounds = array<i64: 32, 1>}, {pipeline_mode = #tpu.pipeline_mode<synchronous>, transform_indices = @transform_8, window_bounds = array<i64: 1, 1>}, {pipeline_mode = #tpu.pipeline_mode<synchronous>, transform_indices = @transform_9, window_bounds = array<i64: 16, 32>}, {pipeline_mode = #tpu.pipeline_mode<synchronous>, transform_indices = @transform_10, window_bounds = array<i64: 16, 1>}, {transform_indices = @transform_11, window_bounds = array<i64: 1, 8>}]} {
    %c0 = arith.constant 0 : index
    %c0_0 = arith.constant 0 : index
    %0 = vector.load %arg2[%c0, %c0_0] : memref<48x48xf32, #tpu.memory_space<vmem>>, vector<48x48xf32>
    %c0_1 = arith.constant 0 : index
    %c0_2 = arith.constant 0 : index
    %1 = vector.load %arg1[%c0_1, %c0_2] : memref<8x48xf32, #tpu.memory_space<vmem>>, vector<8x48xf32>
    %cst = arith.constant dense<0.000000e+00> : vector<48x8xf32>
    %2 = tpu.matmul %0, %1, %cst {dimension_numbers = #tpu.dot_dimension_numbers<[1], [1], [0], [0], [0, 0, 1, 0], [], []>} : vector<48x48xf32>, vector<8x48xf32>, vector<48x8xf32> -> vector<48x8xf32>
    %3 = vector.extract_strided_slice %2 {offsets = [0, 0], sizes = [32, 8], strides = [1, 1]} : vector<48x8xf32> to vector<32x8xf32>
    %c0_3 = arith.constant 0 : index
    %c0_4 = arith.constant 0 : index
    %4 = vector.load %arg3[%c0_3, %c0_4] : memref<32x1xf32, #tpu.memory_space<vmem>>, vector<32x1xf32>
    %5 = vector.broadcast %4 : vector<32x1xf32> to vector<32x8xf32>
    %6 = arith.addf %3, %5 : vector<32x8xf32>
    %cst_5 = arith.constant 0.000000e+00 : f32
    %7 = vector.broadcast %cst_5 : f32 to vector<32x8xf32>
    %8 = arith.maximumf %6, %7 : vector<32x8xf32>
    %9 = vector.extract_strided_slice %2 {offsets = [32, 0], sizes = [16, 8], strides = [1, 1]} : vector<48x8xf32> to vector<16x8xf32>
    %c0_6 = arith.constant 0 : index
    %c0_7 = arith.constant 0 : index
    %10 = vector.load %arg4[%c0_6, %c0_7] : memref<32x32xf32, #tpu.memory_space<vmem>>, vector<32x32xf32>
    %cst_8 = arith.constant dense<0.000000e+00> : vector<32x8xf32>
    %11 = tpu.matmul %10, %8, %cst_8 {dimension_numbers = #tpu.dot_dimension_numbers<[1], [0], [0], [1], [0, 0, 1, 1], [], []>} : vector<32x32xf32>, vector<32x8xf32>, vector<32x8xf32> -> vector<32x8xf32>
    %c0_9 = arith.constant 0 : index
    %c0_10 = arith.constant 0 : index
    %12 = vector.load %arg5[%c0_9, %c0_10] : memref<32x1xf32, #tpu.memory_space<vmem>>, vector<32x1xf32>
    %13 = vector.broadcast %12 : vector<32x1xf32> to vector<32x8xf32>
    %14 = arith.addf %11, %13 : vector<32x8xf32>
    %cst_11 = arith.constant 0.000000e+00 : f32
    %15 = vector.broadcast %cst_11 : f32 to vector<32x8xf32>
    %16 = arith.maximumf %14, %15 : vector<32x8xf32>
    %c0_12 = arith.constant 0 : index
    %c0_13 = arith.constant 0 : index
    %17 = vector.load %arg6[%c0_12, %c0_13] : memref<32x32xf32, #tpu.memory_space<vmem>>, vector<32x32xf32>
    %cst_14 = arith.constant dense<0.000000e+00> : vector<32x8xf32>
    %18 = tpu.matmul %17, %16, %cst_14 {dimension_numbers = #tpu.dot_dimension_numbers<[1], [0], [0], [1], [0, 0, 1, 1], [], []>} : vector<32x32xf32>, vector<32x8xf32>, vector<32x8xf32> -> vector<32x8xf32>
    %c0_15 = arith.constant 0 : index
    %c0_16 = arith.constant 0 : index
    %19 = vector.load %arg7[%c0_15, %c0_16] : memref<32x1xf32, #tpu.memory_space<vmem>>, vector<32x1xf32>
    %20 = vector.broadcast %19 : vector<32x1xf32> to vector<32x8xf32>
    %21 = arith.addf %18, %20 : vector<32x8xf32>
    %cst_17 = arith.constant 0.000000e+00 : f32
    %22 = vector.broadcast %cst_17 : f32 to vector<32x8xf32>
    %23 = arith.maximumf %21, %22 : vector<32x8xf32>
    %c0_18 = arith.constant 0 : index
    %c0_19 = arith.constant 0 : index
    %24 = vector.load %arg8[%c0_18, %c0_19] : memref<32x1xf32, #tpu.memory_space<vmem>>, vector<32x1xf32>
    %25 = vector.broadcast %24 : vector<32x1xf32> to vector<32x8xf32>
    %26 = arith.mulf %25, %23 : vector<32x8xf32>
    %cst_20 = arith.constant dense<0.000000e+00> : vector<8xf32>
    %27 = vector.multi_reduction <add>, %26, %cst_20 [0] : vector<32x8xf32> to vector<8xf32>
    %28 = vector.shape_cast %27 : vector<8xf32> to vector<1x8xf32>
    %c0_21 = arith.constant 0 : index
    %c0_22 = arith.constant 0 : index
    %29 = vector.load %arg9[%c0_21, %c0_22] : memref<1x1xf32, #tpu.memory_space<vmem>>, vector<1x1xf32>
    %30 = vector.broadcast %29 : vector<1x1xf32> to vector<1x8xf32>
    %31 = arith.addf %28, %30 : vector<1x8xf32>
    %c0_23 = arith.constant 0 : index
    %c0_24 = arith.constant 0 : index
    %32 = vector.load %arg10[%c0_23, %c0_24] : memref<16x32xf32, #tpu.memory_space<vmem>>, vector<16x32xf32>
    %cst_25 = arith.constant dense<0.000000e+00> : vector<16x8xf32>
    %33 = tpu.matmul %32, %23, %cst_25 {dimension_numbers = #tpu.dot_dimension_numbers<[1], [0], [0], [1], [0, 0, 1, 1], [], []>} : vector<16x32xf32>, vector<32x8xf32>, vector<16x8xf32> -> vector<16x8xf32>
    %c0_26 = arith.constant 0 : index
    %c0_27 = arith.constant 0 : index
    %34 = vector.load %arg11[%c0_26, %c0_27] : memref<16x1xf32, #tpu.memory_space<vmem>>, vector<16x1xf32>
    %35 = vector.broadcast %34 : vector<16x1xf32> to vector<16x8xf32>
    %36 = arith.addf %33, %35 : vector<16x8xf32>
    %37 = arith.mulf %9, %36 : vector<16x8xf32>
    %cst_28 = arith.constant dense<0.000000e+00> : vector<8xf32>
    %38 = vector.multi_reduction <add>, %37, %cst_28 [0] : vector<16x8xf32> to vector<8xf32>
    %39 = vector.shape_cast %38 : vector<8xf32> to vector<1x8xf32>
    %40 = arith.addf %31, %39 : vector<1x8xf32>
    %c0_29 = arith.constant 0 : index
    %c0_30 = arith.constant 0 : index
    %41 = vector.load %arg12[%c0_29, %c0_30] : memref<1x8xf32, #tpu.memory_space<vmem>>, vector<1x8xf32>
    tpu.vector_store %arg12[%c0_29, %c0_30], %40 {strides = array<i32>} : memref<1x8xf32, #tpu.memory_space<vmem>>, vector<1x8xf32>,
    return
  }
  func.func @transform_0(%arg0: i32) -> (i32, i32) {
    %c0_i32 = arith.constant 0 : i32
    %c0_i32_0 = arith.constant 0 : i32
    return %arg0, %c0_i32 : i32, i32
  }
  func.func @transform_1(%arg0: i32) -> (i32, i32) {
    %c0_i32 = arith.constant 0 : i32
    %c0_i32_0 = arith.constant 0 : i32
    %c0_i32_1 = arith.constant 0 : i32
    return %c0_i32, %c0_i32_0 : i32, i32
  }
  func.func @transform_2(%arg0: i32) -> (i32, i32) {
    %c0_i32 = arith.constant 0 : i32
    %c0_i32_0 = arith.constant 0 : i32
    %c0_i32_1 = arith.constant 0 : i32
    return %c0_i32, %c0_i32_0 : i32, i32
  }
  func.func @transform_3(%arg0: i32) -> (i32, i32) {
    %c0_i32 = arith.constant 0 : i32
    %c0_i32_0 = arith.constant 0 : i32
    %c0_i32_1 = arith.constant 0 : i32
    return %c0_i32, %c0_i32_0 : i32, i32
  }
  func.func @transform_4(%arg0: i32) -> (i32, i32) {
    %c0_i32 = arith.constant 0 : i32
    %c0_i32_0 = arith.constant 0 : i32
    %c0_i32_1 = arith.constant 0 : i32
    return %c0_i32, %c0_i32_0 : i32, i32
  }
  func.func @transform_5(%arg0: i32) -> (i32, i32) {
    %c0_i32 = arith.constant 0 : i32
    %c0_i32_0 = arith.constant 0 : i32
    %c0_i32_1 = arith.constant 0 : i32
    return %c0_i32, %c0_i32_0 : i32, i32
  }
  func.func @transform_6(%arg0: i32) -> (i32, i32) {
    %c0_i32 = arith.constant 0 : i32
    %c0_i32_0 = arith.constant 0 : i32
    %c0_i32_1 = arith.constant 0 : i32
    return %c0_i32, %c0_i32_0 : i32, i32
  }
  func.func @transform_7(%arg0: i32) -> (i32, i32) {
    %c0_i32 = arith.constant 0 : i32
    %c0_i32_0 = arith.constant 0 : i32
    %c0_i32_1 = arith.constant 0 : i32
    return %c0_i32, %c0_i32_0 : i32, i32
  }
  func.func @transform_8(%arg0: i32) -> (i32, i32) {
    %c0_i32 = arith.constant 0 : i32
    %c0_i32_0 = arith.constant 0 : i32
    %c0_i32_1 = arith.constant 0 : i32
    return %c0_i32, %c0_i32_0 : i32, i32
  }
  func.func @transform_9(%arg0: i32) -> (i32, i32) {
    %c0_i32 = arith.constant 0 : i32
    %c0_i32_0 = arith.constant 0 : i32
    %c0_i32_1 = arith.constant 0 : i32
    return %c0_i32, %c0_i32_0 : i32, i32
  }
  func.func @transform_10(%arg0: i32) -> (i32, i32) {
    %c0_i32 = arith.constant 0 : i32
    %c0_i32_0 = arith.constant 0 : i32
    %c0_i32_1 = arith.constant 0 : i32
    return %c0_i32, %c0_i32_0 : i32, i32
  }
  func.func @transform_11(%arg0: i32) -> (i32, i32) {
    %c0_i32 = arith.constant 0 : i32
    %c0_i32_0 = arith.constant 0 : i32
    return %c0_i32, %arg0 : i32, i32
  }
}

</mosaic_0001>

<llo_original>
// kernel: actor_forward.1
$region0: #{actor_forward.1}
  #allocation0 [shape = 'u32[]', space=smem, size = 0x4, offset = 0x4, fixed_abs, tag = 'smem constant byte address 0x4 - core index']
  #allocation1 [shape = 'u32[144,128]{1,0:T(1,128)}', space=vmem, size = 0x12000, scoped, tag = 'internal scratch']
  #allocation2 [shape = 'f32[1,1]{1,0:T(1,128)S(1)}', space=vmem, size = 0x200, scoped, tag = 'scoped memory for actor_forward.1']
  %s0 = inlined_call_operand.vmem [shape: f32[8,48], index: 0, kind: input, shape index: {}]
  %s1 = inlined_call_operand.vmem [shape: f32[48,48], index: 1, kind: input, shape index: {}]
  %s2 = inlined_call_operand.vmem [shape: f32[32,1], index: 2, kind: input, shape index: {}]
  %s3 = inlined_call_operand.vmem [shape: f32[32,32], index: 3, kind: input, shape index: {}]
  %s4 = inlined_call_operand.vmem [shape: f32[32,1], index: 4, kind: input, shape index: {}]
  %s5 = inlined_call_operand.vmem [shape: f32[32,32], index: 5, kind: input, shape index: {}]
  %s6 = inlined_call_operand.vmem [shape: f32[32,1], index: 6, kind: input, shape index: {}]
  %s7 = inlined_call_operand.vmem [shape: f32[32,1], index: 7, kind: input, shape index: {}]
  %s8 = inlined_call_operand.<no memory space> [shape: f32[1,1], index: 8, kind: input, shape index: {}]
  %s9 = inlined_call_operand.vmem [shape: f32[16,32], index: 9, kind: input, shape index: {}]
  %s10 = inlined_call_operand.vmem [shape: f32[16,1], index: 10, kind: input, shape index: {}]
  %s11 = inlined_call_operand.hbm [shape: f32[1,8], index: 11, kind: output, shape index: {}]
  %s12 = sld [smem:[#allocation0]]
  $region54: #{actor_forward.1} parent=0
    _
  %s14 = ssub.s32 1, %s12
  %s15 = scalar_select 0, %s14, %s12
  %v16 = vstv %s8
  %17 = vst [vmem:[#allocation2] sm:$0x1] %v16
  $region1: #{actor_forward.1} parent=0
    #allocation3 [shape = 'u8[512]{0}', space=vmem, size = 0x400, scoped, tag = 'output window, operand 0, single buffered']
    #allocation4 [shape = 's32[1]{0}', space=sflag, size = 0x4, scoped, tag = 'scoped memory for actor_forward.1']
    %18 = vsyncpa [#allocation4], 0
    // Predicated region
    $region2: #{actor_forward.1} parent=1 // pred_check
      _
    $region3: #{actor_forward.1} parent=1 // pred_check_branch
      %20 = sbr.rel (0) target = $region5
    $region4: #{actor_forward.1} parent=1 // pred_region
      _
    $region5: #{actor_forward.1} parent=1 // pred_fallthru
      _
    // Predicated region
    $region6: #{actor_forward.1} parent=1 // pred_check
      _
    $region7: #{actor_forward.1} parent=1 // pred_check_branch
      %22 = sbr.rel (0) target = $region9
    $region8: #{actor_forward.1} parent=1 // pred_region
      _
    $region9: #{actor_forward.1} parent=1 // pred_fallthru
      _
    // Predicated region
    $region10: #{actor_forward.1} parent=1 // pred_check
      _
    $region11: #{actor_forward.1} parent=1 // pred_check_branch
      %24 = sbr.rel (0) target = $region13
    $region12: #{actor_forward.1} parent=1 // pred_region
      _
    $region13: #{actor_forward.1} parent=1 // pred_fallthru
      _
    // Predicated region
    $region14: #{actor_forward.1} parent=1 // pred_check
      _
    $region15: #{actor_forward.1} parent=1 // pred_check_branch
      %26 = sbr.rel (0) target = $region17
    $region16: #{actor_forward.1} parent=1 // pred_region
      _
    $region17: #{actor_forward.1} parent=1 // pred_fallthru
      _
    // Predicated region
    $region18: #{actor_forward.1} parent=1 // pred_check
      _
    $region19: #{actor_forward.1} parent=1 // pred_check_branch
      %28 = sbr.rel (0) target = $region21
    $region20: #{actor_forward.1} parent=1 // pred_region
      _
    $region21: #{actor_forward.1} parent=1 // pred_fallthru
      _
    // Predicated region
    $region22: #{actor_forward.1} parent=1 // pred_check
      _
    $region23: #{actor_forward.1} parent=1 // pred_check_branch
      %30 = sbr.rel (0) target = $region25
    $region24: #{actor_forward.1} parent=1 // pred_region
      _
    $region25: #{actor_forward.1} parent=1 // pred_fallthru
      _
    // Predicated region
    $region26: #{actor_forward.1} parent=1 // pred_check
      _
    $region27: #{actor_forward.1} parent=1 // pred_check_branch
      %32 = sbr.rel (0) target = $region29
    $region28: #{actor_forward.1} parent=1 // pred_region
      _
    $region29: #{actor_forward.1} parent=1 // pred_fallthru
      _
    // Predicated region
    $region30: #{actor_forward.1} parent=1 // pred_check
      _
    $region31: #{actor_forward.1} parent=1 // pred_check_branch
      %34 = sbr.rel (0) target = $region33
    $region32: #{actor_forward.1} parent=1 // pred_region
      _
    $region33: #{actor_forward.1} parent=1 // pred_fallthru
      _
    // Predicated region
    $region34: #{actor_forward.1} parent=1 // pred_check
      _
    $region35: #{actor_forward.1} parent=1 // pred_check_branch
      %36 = sbr.rel (0) target = $region37
    $region36: #{actor_forward.1} parent=1 // pred_region
      _
    $region37: #{actor_forward.1} parent=1 // pred_fallthru
      _
    // Predicated region
    $region38: #{actor_forward.1} parent=1 // pred_check
      _
    $region39: #{actor_forward.1} parent=1 // pred_check_branch
      %38 = sbr.rel (0) target = $region41
    $region40: #{actor_forward.1} parent=1 // pred_region
      _
    $region41: #{actor_forward.1} parent=1 // pred_fallthru
      _
    // Predicated region
    $region42: #{actor_forward.1} parent=1 // pred_check
      _
    $region43: #{actor_forward.1} parent=1 // pred_check_branch
      %40 = sbr.rel (0) target = $region45
    $region44: #{actor_forward.1} parent=1 // pred_region
      _
    $region45: #{actor_forward.1} parent=1 // pred_fallthru
      _
    %v41 = vld [vmem:[%s1] sm:$0xff]
    %v42 = vld [vmem:[%s1 + $0x8] sm:$0xff]
    %v43 = vld [vmem:[%s1 + $0x10] sm:$0xff]
    %v44 = vld [vmem:[%s1 + $0x18] sm:$0xff]
    %v45 = vld [vmem:[%s1 + $0x20] sm:$0xff]
    %v46 = vld [vmem:[%s1 + $0x28] sm:$0xff]
    %v47 = vld [vmem:[%s0] sm:$0xff]
    %vm48 = vcmask 392192
    %v50 = vsel %vm48, %v41, 0
    %v53 = vsel %vm48, %v42, 0
    %v56 = vsel %vm48, %v43, 0
    %v59 = vsel %vm48, %v44, 0
    %v62 = vsel %vm48, %v45, 0
    %v65 = vsel %vm48, %v46, 0
    %v68 = vsel %vm48, %v47, 0
    %70 = vmatprep.subr.mxu0 0.0
    %71 = vmatpush1.xpose.msra.mxu0 %v68
    %72 = vmatprep.subr.mxu0 0.0
    %73 = vmatpush1.xpose.msra.mxu0 0.0
    %74 = vmatprep.subr.mxu0 0.0
    %75 = vmatpush1.xpose.msra.mxu0 0.0
    %76 = vmatprep.subr.mxu0 0.0
    %77 = vmatpush1.xpose.msra.mxu0 0.0
    %78 = vmatprep.subr.mxu0 0.0
    %79 = vmatpush1.xpose.msra.mxu0 0.0
    %80 = vmatprep.subr.mxu0 0.0
    %81 = vmatpush1.xpose.msra.mxu0 0.0
    %82 = vmatprep.subr.mxu0 0.0
    %83 = vmatpush1.xpose.msra.mxu0 0.0
    %84 = vmatprep.subr.mxu0 0.0
    %85 = vmatpush1.xpose.msra.mxu0 0.0
    %86 = vmatprep.subr.mxu0 0.0
    %87 = vmatpush1.xpose.msra.mxu0 0.0
    %88 = vmatprep.subr.mxu0 0.0
    %89 = vmatpush1.xpose.msra.mxu0 0.0
    %90 = vmatprep.subr.mxu0 0.0
    %91 = vmatpush1.xpose.msra.mxu0 0.0
    %92 = vmatprep.subr.mxu0 0.0
    %93 = vmatpush1.xpose.msra.mxu0 0.0
    %94 = vmatprep.subr.mxu0 0.0
    %95 = vmatpush1.xpose.msra.mxu0 0.0
    %96 = vmatprep.subr.mxu0 0.0
    %97 = vmatpush1.xpose.msra.mxu0 0.0
    %98 = vmatprep.subr.mxu0 0.0
    %99 = vmatpush1.xpose.msra.mxu0 0.0
    %100 = vmatprep.subr.mxu0 0.0
    %101 = vmatpush1.xpose.msra.mxu0 0.0
    %102 = vmatprep.subr.mxu0 0.0
    %103 = vmatpush1.xpose.msra.mxu0 0.0
    %104 = vmatprep.subr.mxu0 0.0
    %105 = vmatpush1.xpose.msra.mxu0 0.0
    %106 = vmatprep.subr.mxu0 0.0
    %107 = vmatpush1.xpose.msra.mxu0 0.0
    %108 = vmatprep.subr.mxu0 0.0
    %109 = vmatpush1.xpose.msra.mxu0 0.0
    %110 = vmatprep.subr.mxu0 0.0
    %111 = vmatpush1.xpose.msra.mxu0 0.0
    %112 = vmatprep.subr.mxu0 0.0
    %113 = vmatpush1.xpose.msra.mxu0 0.0
    %114 = vmatprep.subr.mxu0 0.0
    %115 = vmatpush1.xpose.msra.mxu0 0.0
    %116 = vmatprep.subr.mxu0 0.0
    %117 = vmatpush1.xpose.msra.mxu0 0.0
    %118 = vmatprep.subr.mxu0 0.0
    %119 = vmatpush1.xpose.msra.mxu0 0.0
    %120 = vmatprep.subr.mxu0 0.0
    %121 = vmatpush1.xpose.msra.mxu0 0.0
    %122 = vmatprep.subr.mxu0 0.0
    %123 = vmatpush1.xpose.msra.mxu0 0.0
    %124 = vmatprep.subr.mxu0 0.0
    %125 = vmatpush1.xpose.msra.mxu0 0.0
    %126 = vmatprep.subr.mxu0 0.0
    %127 = vmatpush1.xpose.msra.mxu0 0.0
    %128 = vmatprep.subr.mxu0 0.0
    %129 = vmatpush1.xpose.msra.mxu0 0.0
    %130 = vmatprep.subr.mxu0 0.0
    %131 = vmatpush1.xpose.msra.mxu0 0.0
    %132 = vmatprep.subr.mxu0 0.0
    %133 = vmatpush1.xpose.msra.mxu0 0.0
    %134 = vmatprep.mubr.f32.mxu0 0.0
    %135 = vmatmul.mubr.f32.gmra.mrb[0].mxu0 %v50
    %v136 = vpop.f32.mrb[0].mxu0
    %v137 = vadd.f32 0.0, %v136
    %v138 = vpop.f32.mrb[0].mxu0
    %139 = vmatprep.mubr.f32.mxu0 0.0
    %140 = vmatmul.mubr.f32.gmra.mrb[0].mxu0 %v53
    %v141 = vpop.f32.mrb[0].mxu0
    %v142 = vadd.f32 0.0, %v141
    %v143 = vpop.f32.mrb[0].mxu0
    %144 = vmatprep.mubr.f32.mxu0 0.0
    %145 = vmatmul.mubr.f32.gmra.mrb[0].mxu0 %v56
    %v146 = vpop.f32.mrb[0].mxu0
    %v147 = vadd.f32 0.0, %v146
    %v148 = vpop.f32.mrb[0].mxu0
    %149 = vmatprep.mubr.f32.mxu0 0.0
    %150 = vmatmul.mubr.f32.gmra.mrb[0].mxu0 %v59
    %v151 = vpop.f32.mrb[0].mxu0
    %v152 = vadd.f32 0.0, %v151
    %v153 = vpop.f32.mrb[0].mxu0
    %154 = vmatprep.mubr.f32.mxu0 0.0
    %155 = vmatmul.mubr.f32.gmra.mrb[0].mxu0 %v62
    %v156 = vpop.f32.mrb[0].mxu0
    %v157 = vadd.f32 0.0, %v156
    %v158 = vpop.f32.mrb[0].mxu0
    %159 = vmatprep.mubr.f32.mxu0 0.0
    %160 = vmatmul.mubr.f32.gmra.mrb[0].mxu0 %v65
    %v161 = vpop.f32.mrb[0].mxu0
    %v162 = vadd.f32 0.0, %v161
    %v163 = vpop.f32.mrb[0].mxu0
    %164 = vdwg.mxu0
    %v165 = vld [vmem:[%s2] sm:$0xff]
    %v166 = vld [vmem:[%s2 + $0x8] sm:$0xff]
    %v167 = vld [vmem:[%s2 + $0x10] sm:$0xff]
    %v168 = vld [vmem:[%s2 + $0x18] sm:$0xff]
    %170 = vset.pattern.permute.xlu0 0
    %171 = vperm.xlu0 %170, %v165
    %v172 = vpop.permute.xlu0 %171
    %175 = vset.pattern.permute.xlu0 0
    %176 = vperm.xlu0 %175, %v166
    %v177 = vpop.permute.xlu0 %176
    %180 = vset.pattern.permute.xlu0 0
    %181 = vperm.xlu0 %180, %v167
    %v182 = vpop.permute.xlu0 %181
    %185 = vset.pattern.permute.xlu0 0
    %186 = vperm.xlu0 %185, %v168
    %v187 = vpop.permute.xlu0 %186
    %v189 = vadd.f32 %v137, %v172
    %v190 = vadd.f32 %v142, %v177
    %v191 = vadd.f32 %v147, %v182
    %v192 = vadd.f32 %v152, %v187
    %v193 = vmax.f32 %v189, 0.0
    %v194 = vmax.f32 %v190, 0.0
    %v195 = vmax.f32 %v191, 0.0
    %v196 = vmax.f32 %v192, 0.0
    %v197 = vld [vmem:[%s3] sm:$0xff]
    %v198 = vld [vmem:[%s3 + $0x8] sm:$0xff]
    %v199 = vld [vmem:[%s3 + $0x10] sm:$0xff]
    %v200 = vld [vmem:[%s3 + $0x18] sm:$0xff]
    %v201 = vld [vmem:[%s4] sm:$0xff]
    %v202 = vld [vmem:[%s4 + $0x8] sm:$0xff]
    %v203 = vld [vmem:[%s4 + $0x10] sm:$0xff]
    %v204 = vld [vmem:[%s4 + $0x18] sm:$0xff]
    %206 = vset.pattern.permute.xlu0 0
    %207 = vperm.xlu0 %206, %v201
    %v208 = vpop.permute.xlu0 %207
    %211 = vset.pattern.permute.xlu0 0
    %212 = vperm.xlu0 %211, %v202
    %v213 = vpop.permute.xlu0 %212
    %216 = vset.pattern.permute.xlu0 0
    %217 = vperm.xlu0 %216, %v203
    %v218 = vpop.permute.xlu0 %217
    %221 = vset.pattern.permute.xlu0 0
    %222 = vperm.xlu0 %221, %v204
    %v223 = vpop.permute.xlu0 %222
    %vm225 = vcmask 261120
    %v227 = vsel %vm225, %v197, 0
    %v230 = vsel %vm225, %v198, 0
    %v233 = vsel %vm225, %v199, 0
    %v236 = vsel %vm225, %v200, 0
    %238 = vmatprep.subr.mxu0 0.0
    %239 = vmatpush1.msra.mxu0 %v193
    %240 = vmatprep.subr.mxu0 0.0
    %241 = vmatpush1.msra.mxu0 %v194
    %242 = vmatprep.subr.mxu0 0.0
    %243 = vmatpush1.msra.mxu0 %v195
    %244 = vmatprep.subr.mxu0 0.0
    %245 = vmatpush1.msra.mxu0 %v196
    %246 = vmatprep.subr.mxu0 0.0
    %247 = vmatpush1.msra.mxu0 0.0
    %248 = vmatprep.subr.mxu0 0.0
    %249 = vmatpush1.msra.mxu0 0.0
    %250 = vmatprep.subr.mxu0 0.0
    %251 = vmatpush1.msra.mxu0 0.0
    %252 = vmatprep.subr.mxu0 0.0
    %253 = vmatpush1.msra.mxu0 0.0
    %254 = vmatprep.subr.mxu0 0.0
    %255 = vmatpush1.msra.mxu0 0.0
    %256 = vmatprep.subr.mxu0 0.0
    %257 = vmatpush1.msra.mxu0 0.0
    %258 = vmatprep.subr.mxu0 0.0
    %259 = vmatpush1.msra.mxu0 0.0
    %260 = vmatprep.subr.mxu0 0.0
    %261 = vmatpush1.msra.mxu0 0.0
    %262 = vmatprep.subr.mxu0 0.0
    %263 = vmatpush1.msra.mxu0 0.0
    %264 = vmatprep.subr.mxu0 0.0
    %265 = vmatpush1.msra.mxu0 0.0
    %266 = vmatprep.subr.mxu0 0.0
    %267 = vmatpush1.msra.mxu0 0.0
    %268 = vmatprep.subr.mxu0 0.0
    %269 = vmatpush1.msra.mxu0 0.0
    %270 = vmatprep.subr.mxu0 0.0
    %271 = vmatpush1.msra.mxu0 0.0
    %272 = vmatprep.subr.mxu0 0.0
    %273 = vmatpush1.msra.mxu0 0.0
    %274 = vmatprep.subr.mxu0 0.0
    %275 = vmatpush1.msra.mxu0 0.0
    %276 = vmatprep.subr.mxu0 0.0
    %277 = vmatpush1.msra.mxu0 0.0
    %278 = vmatprep.subr.mxu0 0.0
    %279 = vmatpush1.msra.mxu0 0.0
    %280 = vmatprep.subr.mxu0 0.0
    %281 = vmatpush1.msra.mxu0 0.0
    %282 = vmatprep.subr.mxu0 0.0
    %283 = vmatpush1.msra.mxu0 0.0
    %284 = vmatprep.subr.mxu0 0.0
    %285 = vmatpush1.msra.mxu0 0.0
    %286 = vmatprep.subr.mxu0 0.0
    %287 = vmatpush1.msra.mxu0 0.0
    %288 = vmatprep.subr.mxu0 0.0
    %289 = vmatpush1.msra.mxu0 0.0
    %290 = vmatprep.subr.mxu0 0.0
    %291 = vmatpush1.msra.mxu0 0.0
    %292 = vmatprep.subr.mxu0 0.0
    %293 = vmatpush1.msra.mxu0 0.0
    %294 = vmatprep.subr.mxu0 0.0
    %295 = vmatpush1.msra.mxu0 0.0
    %296 = vmatprep.subr.mxu0 0.0
    %297 = vmatpush1.msra.mxu0 0.0
    %298 = vmatprep.subr.mxu0 0.0
    %299 = vmatpush1.msra.mxu0 0.0
    %300 = vmatprep.subr.mxu0 0.0
    %301 = vmatpush1.msra.mxu0 0.0
    %302 = vmatprep.mubr.f32.mxu0 0.0
    %303 = vmatmul.mubr.f32.gmra.mrb[0].mxu0 %v227
    %v304 = vpop.f32.mrb[0].mxu0
    %v305 = vadd.f32 %v208, %v304
    %v306 = vpop.f32.mrb[0].mxu0
    %307 = vmatprep.mubr.f32.mxu0 0.0
    %308 = vmatmul.mubr.f32.gmra.mrb[0].mxu0 %v230
    %v309 = vpop.f32.mrb[0].mxu0
    %v310 = vadd.f32 %v213, %v309
    %v311 = vpop.f32.mrb[0].mxu0
    %312 = vmatprep.mubr.f32.mxu0 0.0
    %313 = vmatmul.mubr.f32.gmra.mrb[0].mxu0 %v233
    %v314 = vpop.f32.mrb[0].mxu0
    %v315 = vadd.f32 %v218, %v314
    %v316 = vpop.f32.mrb[0].mxu0
    %317 = vmatprep.mubr.f32.mxu0 0.0
    %318 = vmatmul.mubr.f32.gmra.mrb[0].mxu0 %v236
    %v319 = vpop.f32.mrb[0].mxu0
    %v320 = vadd.f32 %v223, %v319
    %v321 = vpop.f32.mrb[0].mxu0
    %322 = vdwg.mxu0
    %v323 = vmax.f32 %v305, 0.0
    %v324 = vmax.f32 %v310, 0.0
    %v325 = vmax.f32 %v315, 0.0
    %v326 = vmax.f32 %v320, 0.0
    %v327 = vld [vmem:[%s5] sm:$0xff]
    %v328 = vld [vmem:[%s5 + $0x8] sm:$0xff]
    %v329 = vld [vmem:[%s5 + $0x10] sm:$0xff]
    %v330 = vld [vmem:[%s5 + $0x18] sm:$0xff]
    %v331 = vld [vmem:[%s6] sm:$0xff]
    %v332 = vld [vmem:[%s6 + $0x8] sm:$0xff]
    %v333 = vld [vmem:[%s6 + $0x10] sm:$0xff]
    %v334 = vld [vmem:[%s6 + $0x18] sm:$0xff]
    %336 = vset.pattern.permute.xlu0 0
    %337 = vperm.xlu0 %336, %v331
    %v338 = vpop.permute.xlu0 %337
    %341 = vset.pattern.permute.xlu0 0
    %342 = vperm.xlu0 %341, %v332
    %v343 = vpop.permute.xlu0 %342
    %346 = vset.pattern.permute.xlu0 0
    %347 = vperm.xlu0 %346, %v333
    %v348 = vpop.permute.xlu0 %347
    %351 = vset.pattern.permute.xlu0 0
    %352 = vperm.xlu0 %351, %v334
    %v353 = vpop.permute.xlu0 %352
    %v356 = vsel %vm225, %v327, 0
    %v359 = vsel %vm225, %v328, 0
    %v362 = vsel %vm225, %v329, 0
    %v365 = vsel %vm225, %v330, 0
    %367 = vmatprep.subr.mxu0 0.0
    %368 = vmatpush1.msra.mxu0 %v323
    %369 = vmatprep.subr.mxu0 0.0
    %370 = vmatpush1.msra.mxu0 %v324
    %371 = vmatprep.subr.mxu0 0.0
    %372 = vmatpush1.msra.mxu0 %v325
    %373 = vmatprep.subr.mxu0 0.0
    %374 = vmatpush1.msra.mxu0 %v326
    %375 = vmatprep.subr.mxu0 0.0
    %376 = vmatpush1.msra.mxu0 0.0
    %377 = vmatprep.subr.mxu0 0.0
    %378 = vmatpush1.msra.mxu0 0.0
    %379 = vmatprep.subr.mxu0 0.0
    %380 = vmatpush1.msra.mxu0 0.0
    %381 = vmatprep.subr.mxu0 0.0
    %382 = vmatpush1.msra.mxu0 0.0
    %383 = vmatprep.subr.mxu0 0.0
    %384 = vmatpush1.msra.mxu0 0.0
    %385 = vmatprep.subr.mxu0 0.0
    %386 = vmatpush1.msra.mxu0 0.0
    %387 = vmatprep.subr.mxu0 0.0
    %388 = vmatpush1.msra.mxu0 0.0
    %389 = vmatprep.subr.mxu0 0.0
    %390 = vmatpush1.msra.mxu0 0.0
    %391 = vmatprep.subr.mxu0 0.0
    %392 = vmatpush1.msra.mxu0 0.0
    %393 = vmatprep.subr.mxu0 0.0
    %394 = vmatpush1.msra.mxu0 0.0
    %395 = vmatprep.subr.mxu0 0.0
    %396 = vmatpush1.msra.mxu0 0.0
    %397 = vmatprep.subr.mxu0 0.0
    %398 = vmatpush1.msra.mxu0 0.0
    %399 = vmatprep.subr.mxu0 0.0
    %400 = vmatpush1.msra.mxu0 0.0
    %401 = vmatprep.subr.mxu0 0.0
    %402 = vmatpush1.msra.mxu0 0.0
    %403 = vmatprep.subr.mxu0 0.0
    %404 = vmatpush1.msra.mxu0 0.0
    %405 = vmatprep.subr.mxu0 0.0
    %406 = vmatpush1.msra.mxu0 0.0
    %407 = vmatprep.subr.mxu0 0.0
    %408 = vmatpush1.msra.mxu0 0.0
    %409 = vmatprep.subr.mxu0 0.0
    %410 = vmatpush1.msra.mxu0 0.0
    %411 = vmatprep.subr.mxu0 0.0
    %412 = vmatpush1.msra.mxu0 0.0
    %413 = vmatprep.subr.mxu0 0.0
    %414 = vmatpush1.msra.mxu0 0.0
    %415 = vmatprep.subr.mxu0 0.0
    %416 = vmatpush1.msra.mxu0 0.0
    %417 = vmatprep.subr.mxu0 0.0
    %418 = vmatpush1.msra.mxu0 0.0
    %419 = vmatprep.subr.mxu0 0.0
    %420 = vmatpush1.msra.mxu0 0.0
    %421 = vmatprep.subr.mxu0 0.0
    %422 = vmatpush1.msra.mxu0 0.0
    %423 = vmatprep.subr.mxu0 0.0
    %424 = vmatpush1.msra.mxu0 0.0
    %425 = vmatprep.subr.mxu0 0.0
    %426 = vmatpush1.msra.mxu0 0.0
    %427 = vmatprep.subr.mxu0 0.0
    %428 = vmatpush1.msra.mxu0 0.0
    %429 = vmatprep.subr.mxu0 0.0
    %430 = vmatpush1.msra.mxu0 0.0
    %431 = vmatprep.mubr.f32.mxu0 0.0
    %432 = vmatmul.mubr.f32.gmra.mrb[0].mxu0 %v356
    %v433 = vpop.f32.mrb[0].mxu0
    %v434 = vadd.f32 %v338, %v433
    %v435 = vpop.f32.mrb[0].mxu0
    %436 = vmatprep.mubr.f32.mxu0 0.0
    %437 = vmatmul.mubr.f32.gmra.mrb[0].mxu0 %v359
    %v438 = vpop.f32.mrb[0].mxu0
    %v439 = vadd.f32 %v343, %v438
    %v440 = vpop.f32.mrb[0].mxu0
    %441 = vmatprep.mubr.f32.mxu0 0.0
    %442 = vmatmul.mubr.f32.gmra.mrb[0].mxu0 %v362
    %v443 = vpop.f32.mrb[0].mxu0
    %v444 = vadd.f32 %v348, %v443
    %v445 = vpop.f32.mrb[0].mxu0
    %446 = vmatprep.mubr.f32.mxu0 0.0
    %447 = vmatmul.mubr.f32.gmra.mrb[0].mxu0 %v365
    %v448 = vpop.f32.mrb[0].mxu0
    %v449 = vadd.f32 %v353, %v448
    %v450 = vpop.f32.mrb[0].mxu0
    %451 = vdwg.mxu0
    %v452 = vmax.f32 %v434, 0.0
    %v453 = vmax.f32 %v439, 0.0
    %v454 = vmax.f32 %v444, 0.0
    %v455 = vmax.f32 %v449, 0.0
    %v456 = vld [vmem:[%s7] sm:$0xff]
    %v457 = vld [vmem:[%s7 + $0x8] sm:$0xff]
    %v458 = vld [vmem:[%s7 + $0x10] sm:$0xff]
    %v459 = vld [vmem:[%s7 + $0x18] sm:$0xff]
    %461 = vset.pattern.permute.xlu0 0
    %462 = vperm.xlu0 %461, %v456
    %v463 = vpop.permute.xlu0 %462
    %466 = vset.pattern.permute.xlu0 0
    %467 = vperm.xlu0 %466, %v457
    %v468 = vpop.permute.xlu0 %467
    %471 = vset.pattern.permute.xlu0 0
    %472 = vperm.xlu0 %471, %v458
    %v473 = vpop.permute.xlu0 %472
    %476 = vset.pattern.permute.xlu0 0
    %477 = vperm.xlu0 %476, %v459
    %v478 = vpop.permute.xlu0 %477
    %v480 = vmul.f32 %v463, %v452
    %v481 = vmul.f32 %v468, %v453
    %v482 = vmul.f32 %v473, %v454
    %v483 = vmul.f32 %v478, %v455
    %vm484 = vcmask 64512
    %v485 = vsel %vm484, %v480, 0.0
    %v486 = vsel %vm484, %v481, 0.0
    %v487 = vadd.f32 %v485, %v486
    %v488 = vsel %vm484, %v482, 0.0
    %v489 = vadd.f32 %v487, %v488
    %v490 = vsel %vm484, %v483, 0.0
    %v491 = vadd.f32 %v489, %v490
    %v492 = vrot.slane %v491, 4
    %v493 = vadd.f32 %v491, %v492
    %v494 = vrot.slane %v493, 2
    %v495 = vadd.f32 %v493, %v494
    %v496 = vrot.slane %v495, 1
    %v497 = vadd.f32 %v495, %v496
    %v498 = vld [vmem:[#allocation2] sm:$0x1]
    %500 = vset.pattern.permute.xlu0 0
    %501 = vperm.xlu0 %500, %v498
    %v502 = vpop.permute.xlu0 %501
    %v504 = vlaneseq
    %v505 = vshrl.u32 %v504, 7
    %v506 = vsub.s32 0, %v505
    %v507 = vrot.slane %v502, %v506
    %v508 = vadd.f32 %v497, %v507
    %v509 = vld [vmem:[%s9] sm:$0xff]
    %v510 = vld [vmem:[%s9 + $0x8] sm:$0xff]
    %v511 = vld [vmem:[%s10] sm:$0xff]
    %v512 = vld [vmem:[%s10 + $0x8] sm:$0xff]
    %514 = vset.pattern.permute.xlu0 0
    %515 = vperm.xlu0 %514, %v511
    %v516 = vpop.permute.xlu0 %515
    %519 = vset.pattern.permute.xlu0 0
    %520 = vperm.xlu0 %519, %v512
    %v521 = vpop.permute.xlu0 %520
    %v524 = vsel %vm225, %v509, 0
    %v527 = vsel %vm225, %v510, 0
    %529 = vmatprep.subr.mxu0 0.0
    %530 = vmatpush1.msra.mxu0 %v452
    %531 = vmatprep.subr.mxu0 0.0
    %532 = vmatpush1.msra.mxu0 %v453
    %533 = vmatprep.subr.mxu0 0.0
    %534 = vmatpush1.msra.mxu0 %v454
    %535 = vmatprep.subr.mxu0 0.0
    %536 = vmatpush1.msra.mxu0 %v455
    %537 = vmatprep.subr.mxu0 0.0
    %538 = vmatpush1.msra.mxu0 0.0
    %539 = vmatprep.subr.mxu0 0.0
    %540 = vmatpush1.msra.mxu0 0.0
    %541 = vmatprep.subr.mxu0 0.0
    %542 = vmatpush1.msra.mxu0 0.0
    %543 = vmatprep.subr.mxu0 0.0
    %544 = vmatpush1.msra.mxu0 0.0
    %545 = vmatprep.subr.mxu0 0.0
    %546 = vmatpush1.msra.mxu0 0.0
    %547 = vmatprep.subr.mxu0 0.0
    %548 = vmatpush1.msra.mxu0 0.0
    %549 = vmatprep.subr.mxu0 0.0
    %550 = vmatpush1.msra.mxu0 0.0
    %551 = vmatprep.subr.mxu0 0.0
    %552 = vmatpush1.msra.mxu0 0.0
    %553 = vmatprep.subr.mxu0 0.0
    %554 = vmatpush1.msra.mxu0 0.0
    %555 = vmatprep.subr.mxu0 0.0
    %556 = vmatpush1.msra.mxu0 0.0
    %557 = vmatprep.subr.mxu0 0.0
    %558 = vmatpush1.msra.mxu0 0.0
    %559 = vmatprep.subr.mxu0 0.0
    %560 = vmatpush1.msra.mxu0 0.0
    %561 = vmatprep.subr.mxu0 0.0
    %562 = vmatpush1.msra.mxu0 0.0
    %563 = vmatprep.subr.mxu0 0.0
    %564 = vmatpush1.msra.mxu0 0.0
    %565 = vmatprep.subr.mxu0 0.0
    %566 = vmatpush1.msra.mxu0 0.0
    %567 = vmatprep.subr.mxu0 0.0
    %568 = vmatpush1.msra.mxu0 0.0
    %569 = vmatprep.subr.mxu0 0.0
    %570 = vmatpush1.msra.mxu0 0.0
    %571 = vmatprep.subr.mxu0 0.0
    %572 = vmatpush1.msra.mxu0 0.0
    %573 = vmatprep.subr.mxu0 0.0
    %574 = vmatpush1.msra.mxu0 0.0
    %575 = vmatprep.subr.mxu0 0.0
    %576 = vmatpush1.msra.mxu0 0.0
    %577 = vmatprep.subr.mxu0 0.0
    %578 = vmatpush1.msra.mxu0 0.0
    %579 = vmatprep.subr.mxu0 0.0
    %580 = vmatpush1.msra.mxu0 0.0
    %581 = vmatprep.subr.mxu0 0.0
    %582 = vmatpush1.msra.mxu0 0.0
    %583 = vmatprep.subr.mxu0 0.0
    %584 = vmatpush1.msra.mxu0 0.0
    %585 = vmatprep.subr.mxu0 0.0
    %586 = vmatpush1.msra.mxu0 0.0
    %587 = vmatprep.subr.mxu0 0.0
    %588 = vmatpush1.msra.mxu0 0.0
    %589 = vmatprep.subr.mxu0 0.0
    %590 = vmatpush1.msra.mxu0 0.0
    %591 = vmatprep.subr.mxu0 0.0
    %592 = vmatpush1.msra.mxu0 0.0
    %593 = vmatprep.mubr.f32.mxu0 0.0
    %594 = vmatmul.mubr.f32.gmra.mrb[0].mxu0 %v524
    %v595 = vpop.f32.mrb[0].mxu0
    %v596 = vadd.f32 %v516, %v595
    %v597 = vpop.f32.mrb[0].mxu0
    %598 = vmatprep.mubr.f32.mxu0 0.0
    %599 = vmatmul.mubr.f32.gmra.mrb[0].mxu0 %v527
    %v600 = vpop.f32.mrb[0].mxu0
    %v601 = vadd.f32 %v521, %v600
    %v602 = vpop.f32.mrb[0].mxu0
    %603 = vdwg.mxu0
    %v604 = vmul.f32 %v157, %v596
    %v605 = vmul.f32 %v162, %v601
    %v606 = vsel %vm484, %v604, 0.0
    %v607 = vsel %vm484, %v605, 0.0
    %v608 = vadd.f32 %v606, %v607
    %v609 = vrot.slane %v608, 4
    %v610 = vadd.f32 %v608, %v609
    %v611 = vrot.slane %v610, 2
    %v612 = vadd.f32 %v610, %v611
    %v613 = vrot.slane %v612, 1
    %v614 = vadd.f32 %v612, %v613
    %v615 = vadd.f32 %v508, %v614
    %vm616 = vcmask 57344
    %617 = vst.msk [vmem:[#allocation3] sm:$0x1] %vm616, %v615
    // Predicated region
    $region46: #{actor_forward.1} parent=1 // pred_check
      _
    $region47: #{actor_forward.1} parent=1 // pred_check_branch
      %619 = sbr.rel (0) target = $region49
    $region48: #{actor_forward.1} parent=1 // pred_region
      %s621 = ssub.s32 16, 16
      %622 = vsyncadd [#allocation4], %s621
      %s624 = sshll.u32 [#allocation3], 4
      %s625 = int_to_ptr.vmem [resolvable:$true] %s624
      %627 = dma.vmem_to_hbm [thread:$0]  %s625, 16, %s11, [#allocation4]
    $region49: #{actor_forward.1} parent=1 // pred_fallthru
      _
    // Predicated region
    $region50: #{actor_forward.1} parent=1 // pred_check
      _
    $region51: #{actor_forward.1} parent=1 // pred_check_branch
      %629 = sbr.rel (0) target = $region53
    $region52: #{actor_forward.1} parent=1 // pred_region
      %630 = dma.done [#allocation4], 16
    $region53: #{actor_forward.1} parent=1 // pred_fallthru
      _
    %631 = vsyncpa [#allocation4], 1

</llo_original>
